<compile_context>
chip_gen: v7x
topology: tpu7x:2x2x1
jax: 0.10.0
libtpu: 0.0.40
codegen_flags: <defaults>
</compile_context>

<pallas_src>
from functools import partial

import jax
import jax.numpy as jnp
from jax.experimental import pallas as pl
from jax.experimental.pallas import tpu as pltpu

N_FEATURE = 22
N_HIDDEN = 300
N_OUTPUT = 10
N_OUTPUT_PAD = 128          # lane-dense output width
NEG_BIG = -1e30             # mask value for padded logits (finite, exp -> 0)


def _round_up(n, m):
    return ((n + m - 1) // m) * m


def bpnn_kernel(x_ref, w1_ref, b1_ref, w2_ref, b2_ref, out_ref):
    # Hidden layer: relu(x @ W1 + b1); bf16 into the MXU, f32 accumulate.
    x = x_ref[...]                                             # (TB, 22) bf16
    h = jnp.dot(x, w1_ref[...], preferred_element_type=jnp.float32)
    h = jnp.maximum(h + b1_ref[...], 0.0)                      # f32 (TB, 300)

    # Output layer: logits = h @ W2 + b2 (W2 padded to 128 cols with zeros,
    # b2 padded with -1e30 so the padded classes vanish in the softmax).
    logits = jnp.dot(h.astype(w2_ref.dtype), w2_ref[...],
                     preferred_element_type=jnp.float32)
    logits = logits + b2_ref[...]                              # (TB, 128) f32

    # Numerically stable softmax over the (lane-dense) class axis.
    m = jnp.max(logits, axis=1, keepdims=True)
    e = jnp.exp(logits - m)
    denom = jnp.sum(e, axis=1, keepdims=True)
    out_ref[...] = e * pl.reciprocal(denom, approx=True)


@partial(jax.jit, static_argnames=("tb",))
def bpnn_forward(x, w1, b1, w2, b2, *, tb=512):
    """x: (B, 22) f32; w1: (22, 300); b1: (1, 300); w2: (300, 10); b2: (1, 10).
    Weights are stored as [in, out] (transposed PyTorch layout)."""
    B = x.shape[0]

    # Batch tile: multiple of 8 sublanes, capped by the (rounded-up) batch.
    tb_eff = min(tb, _round_up(B, 8))
    B_pad = _round_up(B, tb_eff)
    if B_pad != B:
        x = jnp.pad(x, ((0, B_pad - B), (0, 0)))

    # Pad the output layer to a lane-dense 128 classes.
    w2p = jnp.zeros((N_HIDDEN, N_OUTPUT_PAD), jnp.float32).at[:, :N_OUTPUT].set(w2)
    b2p = jnp.full((1, N_OUTPUT_PAD), NEG_BIG, jnp.float32).at[:, :N_OUTPUT].set(b2)

    # bf16 into the MXU (x is the only array scaling with B); biases stay f32.
    x_bf = x.astype(jnp.bfloat16)
    w1_bf = w1.astype(jnp.bfloat16)
    w2_bf = w2p.astype(jnp.bfloat16)

    grid = (B_pad // tb_eff,)

    out = pl.pallas_call(
        bpnn_kernel,
        out_shape=jax.ShapeDtypeStruct((B_pad, N_OUTPUT_PAD), jnp.float32),
        grid=grid,
        in_specs=[
            pl.BlockSpec((tb_eff, N_FEATURE), lambda i: (i, 0)),       # x tile
            pl.BlockSpec((N_FEATURE, N_HIDDEN), lambda i: (0, 0)),     # W1 (resident)
            pl.BlockSpec((1, N_HIDDEN), lambda i: (0, 0)),             # b1 (resident)
            pl.BlockSpec((N_HIDDEN, N_OUTPUT_PAD), lambda i: (0, 0)),  # W2 (resident)
            pl.BlockSpec((1, N_OUTPUT_PAD), lambda i: (0, 0)),         # b2 (resident)
        ],
        out_specs=pl.BlockSpec((tb_eff, N_OUTPUT_PAD), lambda i: (i, 0)),
        compiler_params=pltpu.CompilerParams(
            dimension_semantics=("parallel",)),
    )(x_bf, w1_bf, b1, w2_bf, b2p)

    return out[:B, :N_OUTPUT]


def init_params(key):
    """torch.nn.Linear-style init: U(-1/sqrt(fan_in), 1/sqrt(fan_in)).
    Weights stored as [in, out] (W^T of the PyTorch layout)."""
    k1, k2, k3, k4 = jax.random.split(key, 4)
    lim1 = 1.0 / jnp.sqrt(float(N_FEATURE))
    lim2 = 1.0 / jnp.sqrt(float(N_HIDDEN))
    w1 = jax.random.uniform(k1, (N_FEATURE, N_HIDDEN), jnp.float32, -lim1, lim1)
    b1 = jax.random.uniform(k2, (1, N_HIDDEN), jnp.float32, -lim1, lim1)
    w2 = jax.random.uniform(k3, (N_HIDDEN, N_OUTPUT), jnp.float32, -lim2, lim2)
    b2 = jax.random.uniform(k4, (1, N_OUTPUT), jnp.float32, -lim2, lim2)
    return w1, b1, w2, b2


def _ref_f32(x, w1, b1, w2, b2):
    h = jnp.maximum(x @ w1 + b1, 0.0)
    return jax.nn.softmax(h @ w2 + b2, axis=1)


def _ref_bf16_mxu(x, w1, b1, w2, b2):
    """Reference matching the kernel's bf16-in / f32-accumulate matmuls."""
    h = jnp.dot(x.astype(jnp.bfloat16), w1.astype(jnp.bfloat16),
                preferred_element_type=jnp.float32) + b1
    h = jnp.maximum(h, 0.0)
    logits = jnp.dot(h.astype(jnp.bfloat16), w2.astype(jnp.bfloat16),
                     preferred_element_type=jnp.float32) + b2
    return jax.nn.softmax(logits, axis=1)


if __name__ == "__main__":
    key = jax.random.PRNGKey(0)
    kx, kp = jax.random.split(key)

    w1, b1, w2, b2 = init_params(kp)

    # Small single-block case (grid of 1).
    batch = 8
    x = jax.random.normal(kx, (batch, N_FEATURE), jnp.float32)
    out = jax.block_until_ready(bpnn_forward(x, w1, b1, w2, b2))
    assert out.shape == (batch, N_OUTPUT)
    assert jnp.allclose(out, _ref_bf16_mxu(x, w1, b1, w2, b2), atol=1e-2, rtol=1e-2)
    assert jnp.allclose(out, _ref_f32(x, w1, b1, w2, b2), atol=2e-2, rtol=2e-2)
    assert jnp.allclose(jnp.sum(out, axis=1), 1.0, atol=5e-3)

    # Multi-step grid + batch padding exercise (B not a multiple of the tile).
    batch2 = 60
    x2 = jax.random.normal(jax.random.PRNGKey(1), (batch2, N_FEATURE), jnp.float32)
    out2 = jax.block_until_ready(bpnn_forward(x2, w1, b1, w2, b2, tb=16))
    assert out2.shape == (batch2, N_OUTPUT)
    assert jnp.allclose(out2, _ref_bf16_mxu(x2, w1, b1, w2, b2), atol=1e-2, rtol=1e-2)
    assert jnp.allclose(jnp.sum(out2, axis=1), 1.0, atol=5e-3)

    print("KERNEL_OK")
</pallas_src>

<mosaic_0001>
module attributes {stable_mosaic.version = 11 : i64} {
  func.func @bpnn_kernel(%arg0: i32, %arg1: memref<8x22xbf16, #tpu.memory_space<vmem>>, %arg2: memref<22x300xbf16, #tpu.memory_space<vmem>>, %arg3: memref<1x300xf32, #tpu.memory_space<vmem>>, %arg4: memref<300x128xbf16, #tpu.memory_space<vmem>>, %arg5: memref<1x128xf32, #tpu.memory_space<vmem>>, %arg6: memref<8x128xf32, #tpu.memory_space<vmem>>) attributes {dimension_semantics = [#tpu.dimension_semantics<parallel>], iteration_bounds = array<i64: 1>, scalar_prefetch = 0 : i64, scratch_operands = 0 : i64, tpu.core_type = #tpu.core_type<tc>, window_params = [{transform_indices = @transform_0, window_bounds = array<i64: 8, 22>}, {pipeline_mode = #tpu.pipeline_mode<synchronous>, transform_indices = @transform_1, window_bounds = array<i64: 22, 300>}, {pipeline_mode = #tpu.pipeline_mode<synchronous>, transform_indices = @transform_2, window_bounds = array<i64: 1, 300>}, {pipeline_mode = #tpu.pipeline_mode<synchronous>, transform_indices = @transform_3, window_bounds = array<i64: 300, 128>}, {pipeline_mode = #tpu.pipeline_mode<synchronous>, transform_indices = @transform_4, window_bounds = array<i64: 1, 128>}, {transform_indices = @transform_5, window_bounds = array<i64: 8, 128>}]} {
    %c0 = arith.constant 0 : index
    %c0_0 = arith.constant 0 : index
    %0 = vector.load %arg1[%c0, %c0_0] : memref<8x22xbf16, #tpu.memory_space<vmem>>, vector<8x22xbf16>
    %c0_1 = arith.constant 0 : index
    %c0_2 = arith.constant 0 : index
    %1 = vector.load %arg2[%c0_1, %c0_2] : memref<22x300xbf16, #tpu.memory_space<vmem>>, vector<22x300xbf16>
    %cst = arith.constant dense<0.000000e+00> : vector<8x300xf32>
    %2 = tpu.matmul %0, %1, %cst {dimension_numbers = #tpu.dot_dimension_numbers<[1], [0], [0], [1], [0, 0, 1, 1], [], []>} : vector<8x22xbf16>, vector<22x300xbf16>, vector<8x300xf32> -> vector<8x300xf32>
    %c0_3 = arith.constant 0 : index
    %c0_4 = arith.constant 0 : index
    %3 = vector.load %arg3[%c0_3, %c0_4] : memref<1x300xf32, #tpu.memory_space<vmem>>, vector<1x300xf32>
    %4 = vector.broadcast %3 : vector<1x300xf32> to vector<8x300xf32>
    %5 = arith.addf %2, %4 : vector<8x300xf32>
    %cst_5 = arith.constant 0.000000e+00 : f32
    %6 = vector.broadcast %cst_5 : f32 to vector<8x300xf32>
    %7 = arith.maximumf %5, %6 : vector<8x300xf32>
    %8 = arith.truncf %7 : vector<8x300xf32> to vector<8x300xbf16>
    %c0_6 = arith.constant 0 : index
    %c0_7 = arith.constant 0 : index
    %9 = vector.load %arg4[%c0_6, %c0_7] : memref<300x128xbf16, #tpu.memory_space<vmem>>, vector<300x128xbf16>
    %cst_8 = arith.constant dense<0.000000e+00> : vector<8x128xf32>
    %10 = tpu.matmul %8, %9, %cst_8 {dimension_numbers = #tpu.dot_dimension_numbers<[1], [0], [0], [1], [0, 0, 1, 1], [], []>} : vector<8x300xbf16>, vector<300x128xbf16>, vector<8x128xf32> -> vector<8x128xf32>
    %c0_9 = arith.constant 0 : index
    %c0_10 = arith.constant 0 : index
    %11 = vector.load %arg5[%c0_9, %c0_10] : memref<1x128xf32, #tpu.memory_space<vmem>>, vector<1x128xf32>
    %12 = vector.broadcast %11 : vector<1x128xf32> to vector<8x128xf32>
    %13 = arith.addf %10, %12 : vector<8x128xf32>
    %cst_11 = arith.constant dense<0xFF800000> : vector<8xf32>
    %14 = vector.multi_reduction <maximumf>, %13, %cst_11 [1] : vector<8x128xf32> to vector<8xf32>
    %15 = vector.shape_cast %14 : vector<8xf32> to vector<8x1xf32>
    %16 = vector.broadcast %15 : vector<8x1xf32> to vector<8x128xf32>
    %17 = arith.subf %13, %16 : vector<8x128xf32>
    %18 = math.exp %17 : vector<8x128xf32>
    %cst_12 = arith.constant dense<0.000000e+00> : vector<8xf32>
    %19 = vector.multi_reduction <add>, %18, %cst_12 [1] : vector<8x128xf32> to vector<8xf32>
    %20 = vector.shape_cast %19 : vector<8xf32> to vector<8x1xf32>
    %21 = tpu.reciprocal %20 {approx = true} : vector<8x1xf32> -> vector<8x1xf32>
    %22 = vector.broadcast %21 : vector<8x1xf32> to vector<8x128xf32>
    %23 = arith.mulf %18, %22 : vector<8x128xf32>
    %c0_13 = arith.constant 0 : index
    %c0_14 = arith.constant 0 : index
    %24 = vector.load %arg6[%c0_13, %c0_14] : memref<8x128xf32, #tpu.memory_space<vmem>>, vector<8x128xf32>
    tpu.vector_store %arg6[%c0_13, %c0_14], %23 {strides = array<i32>} : memref<8x128xf32, #tpu.memory_space<vmem>>, vector<8x128xf32>,
    return
  }
  func.func @transform_0(%arg0: i32) -> (i32, i32) {
    %c0_i32 = arith.constant 0 : i32
    %c0_i32_0 = arith.constant 0 : i32
    return %arg0, %c0_i32 : i32, i32
  }
  func.func @transform_1(%arg0: i32) -> (i32, i32) {
    %c0_i32 = arith.constant 0 : i32
    %c0_i32_0 = arith.constant 0 : i32
    %c0_i32_1 = arith.constant 0 : i32
    return %c0_i32, %c0_i32_0 : i32, i32
  }
  func.func @transform_2(%arg0: i32) -> (i32, i32) {
    %c0_i32 = arith.constant 0 : i32
    %c0_i32_0 = arith.constant 0 : i32
    %c0_i32_1 = arith.constant 0 : i32
    return %c0_i32, %c0_i32_0 : i32, i32
  }
  func.func @transform_3(%arg0: i32) -> (i32, i32) {
    %c0_i32 = arith.constant 0 : i32
    %c0_i32_0 = arith.constant 0 : i32
    %c0_i32_1 = arith.constant 0 : i32
    return %c0_i32, %c0_i32_0 : i32, i32
  }
  func.func @transform_4(%arg0: i32) -> (i32, i32) {
    %c0_i32 = arith.constant 0 : i32
    %c0_i32_0 = arith.constant 0 : i32
    %c0_i32_1 = arith.constant 0 : i32
    return %c0_i32, %c0_i32_0 : i32, i32
  }
  func.func @transform_5(%arg0: i32) -> (i32, i32) {
    %c0_i32 = arith.constant 0 : i32
    %c0_i32_0 = arith.constant 0 : i32
    return %arg0, %c0_i32 : i32, i32
  }
}

</mosaic_0001>

<llo_original>
// kernel: bpnn_forward.1
$region0: #{bpnn_forward.1}
  #allocation0 [shape = 'u32[]', space=smem, size = 0x4, offset = 0x4, fixed_abs, tag = 'smem constant byte address 0x4 - core index']
  #allocation1 [shape = 'u32[144,128]{1,0:T(1,128)}', space=vmem, size = 0x12000, scoped, tag = 'internal scratch']
  %s0 = inlined_call_operand.vmem [shape: bf16[8,22], index: 0, kind: input, shape index: {}]
  %s1 = inlined_call_operand.vmem [shape: bf16[22,300], index: 1, kind: input, shape index: {}]
  %s2 = inlined_call_operand.vmem [shape: f32[1,300], index: 2, kind: input, shape index: {}]
  %s3 = inlined_call_operand.vmem [shape: bf16[300,128], index: 3, kind: input, shape index: {}]
  %s4 = inlined_call_operand.vmem [shape: f32[1,128], index: 4, kind: input, shape index: {}]
  %s5 = inlined_call_operand.hbm [shape: f32[8,128], index: 5, kind: output, shape index: {}]
  %s6 = sld [smem:[#allocation0]]
  $region30: #{bpnn_forward.1} parent=0
    _
  %s8 = ssub.s32 1, %s6
  %s9 = scalar_select 0, %s8, %s6
  $region1: #{bpnn_forward.1} parent=0
    #allocation2 [shape = 'u8[4096]{0}', space=vmem, size = 0x1000, scoped, tag = 'output window, operand 0, single buffered']
    #allocation3 [shape = 's32[1]{0}', space=sflag, size = 0x4, scoped, tag = 'scoped memory for bpnn_forward.1']
    %10 = vsyncpa [#allocation3], 0
    // Predicated region
    $region2: #{bpnn_forward.1} parent=1 // pred_check
      _
    $region3: #{bpnn_forward.1} parent=1 // pred_check_branch
      %12 = sbr.rel (0) target = $region5
    $region4: #{bpnn_forward.1} parent=1 // pred_region
      _
    $region5: #{bpnn_forward.1} parent=1 // pred_fallthru
      _
    // Predicated region
    $region6: #{bpnn_forward.1} parent=1 // pred_check
      _
    $region7: #{bpnn_forward.1} parent=1 // pred_check_branch
      %14 = sbr.rel (0) target = $region9
    $region8: #{bpnn_forward.1} parent=1 // pred_region
      _
    $region9: #{bpnn_forward.1} parent=1 // pred_fallthru
      _
    // Predicated region
    $region10: #{bpnn_forward.1} parent=1 // pred_check
      _
    $region11: #{bpnn_forward.1} parent=1 // pred_check_branch
      %16 = sbr.rel (0) target = $region13
    $region12: #{bpnn_forward.1} parent=1 // pred_region
      _
    $region13: #{bpnn_forward.1} parent=1 // pred_fallthru
      _
    // Predicated region
    $region14: #{bpnn_forward.1} parent=1 // pred_check
      _
    $region15: #{bpnn_forward.1} parent=1 // pred_check_branch
      %18 = sbr.rel (0) target = $region17
    $region16: #{bpnn_forward.1} parent=1 // pred_region
      _
    $region17: #{bpnn_forward.1} parent=1 // pred_fallthru
      _
    // Predicated region
    $region18: #{bpnn_forward.1} parent=1 // pred_check
      _
    $region19: #{bpnn_forward.1} parent=1 // pred_check_branch
      %20 = sbr.rel (0) target = $region21
    $region20: #{bpnn_forward.1} parent=1 // pred_region
      _
    $region21: #{bpnn_forward.1} parent=1 // pred_fallthru
      _
    %v22 = vld [vmem:[%s0] sm:$0xf]
    %v23 = vld [vmem:[%s1] sm:$0xff]
    %v24 = vld [vmem:[%s1 + $0x8] sm:$0xf]
    %v25 = vld [vmem:[%s1 + $0xc] sm:$0xff]
    %v26 = vld [vmem:[%s1 + $0x14] sm:$0xf]
    %v27 = vld [vmem:[%s1 + $0x18] sm:$0x77]
    %v28 = vld [vmem:[%s1 + $0x20] sm:$0x7]
    %v29 = vld [vmem:[%s2] sm:$0x7]
    %v31 = vlaneseq
    %v32 = vshrl.u32 %v31, 7
    %v33 = vsub.s32 0, %v32
    %v34 = vrot.slane %v29, %v33
    %v35 = vlaneseq
    %v36 = vshrl.u32 %v35, 7
    %v37 = vsub.s32 1, %v36
    %v38 = vrot.slane %v29, %v37
    %v39 = vlaneseq
    %v40 = vshrl.u32 %v39, 7
    %v41 = vsub.s32 2, %v40
    %v42 = vrot.slane %v29, %v41
    %v52 = vunpack.c.l.b16 %v23
    %v53 = vunpack.c.h.b16 %v23
    %v54 = vunpack.c.l.b16 %v24
    %v55 = vunpack.c.l.b16 %v25
    %v56 = vunpack.c.h.b16 %v25
    %v57 = vunpack.c.l.b16 %v26
    %v58 = vunpack.c.l.b16 %v27
    %v59 = vunpack.c.h.b16 %v27
    %v60 = vunpack.c.l.b16 %v28
    %v61 = vpack.c.b16 %v55, %v52
    %v62 = vpack.c.b16 %v56, %v53
    %v63 = vpack.c.b16 %v57, %v54
    %v64 = vpack.c.b16 %v58, %v58
    %v65 = vpack.c.b16 %v59, %v59
    %v66 = vpack.c.b16 %v60, %v60
    %vm70 = vcmask 179200
    %v72 = vsel %vm70, %v22, 0
    %vm74 = vcmask 1042432
    %v76 = vsel %vm74, %v64, 0
    %v79 = vsel %vm74, %v65, 0
    %v82 = vsel %vm74, %v66, 0
    %84 = vmatprep.subr.bf16.mxu0 %v62
    %85 = vmatpush1.bf16.msra.mxu0 %v61
    %86 = vmatprep.subr.bf16.mxu0 %v79
    %87 = vmatpush1.bf16.msra.mxu0 %v76
    %88 = vmatprep.subr.bf16.mxu0 0
    %89 = vmatpush1.bf16.msra.mxu0 0
    %90 = vmatprep.subr.bf16.mxu0 0
    %91 = vmatpush1.bf16.msra.mxu0 0
    %92 = vmatprep.subr.bf16.mxu0 0
    %93 = vmatpush1.bf16.msra.mxu0 0
    %94 = vmatprep.subr.bf16.mxu0 0
    %95 = vmatpush1.bf16.msra.mxu0 0
    %96 = vmatprep.subr.bf16.mxu0 0
    %97 = vmatpush1.bf16.msra.mxu0 0
    %98 = vmatprep.subr.bf16.mxu0 0
    %99 = vmatpush1.bf16.msra.mxu0 0
    %100 = vmatprep.subr.bf16.mxu0 0
    %101 = vmatpush1.bf16.msra.mxu0 0
    %102 = vmatprep.subr.bf16.mxu0 0
    %103 = vmatpush1.bf16.msra.mxu0 0
    %104 = vmatprep.subr.bf16.mxu0 0
    %105 = vmatpush1.bf16.msra.mxu0 0
    %106 = vmatprep.subr.bf16.mxu0 0
    %107 = vmatpush1.bf16.msra.mxu0 0
    %108 = vmatprep.subr.bf16.mxu0 0
    %109 = vmatpush1.bf16.msra.mxu0 0
    %110 = vmatprep.subr.bf16.mxu0 0
    %111 = vmatpush1.bf16.msra.mxu0 0
    %112 = vmatprep.subr.bf16.mxu0 0
    %113 = vmatpush1.bf16.msra.mxu0 0
    %114 = vmatprep.subr.bf16.mxu0 0
    %115 = vmatpush1.bf16.msra.mxu0 0
    %116 = vmatprep.mubr.bf16.mxu0 0
    %117 = vmatmul.mubr.bf16.gmra.mrb[0].mxu0 %v72
    %v118 = vpop.f32.mrb[0].mxu0
    %v119 = vadd.f32 %v34, %v118
    %v120 = vpop.f32.mrb[0].mxu0
    %v121 = vadd.f32 %v38, %v120
    %v122 = vpop.f32.mrb[0].mxu0
    %v123 = vpop.f32.mrb[0].mxu0
    %124 = vdwg.mxu0
    %125 = vmatprep.subr.bf16.mxu0 0
    %126 = vmatpush1.bf16.msra.mxu0 %v63
    %127 = vmatprep.subr.bf16.mxu0 0
    %128 = vmatpush1.bf16.msra.mxu0 %v82
    %129 = vmatprep.subr.bf16.mxu0 0
    %130 = vmatpush1.bf16.msra.mxu0 0
    %131 = vmatprep.subr.bf16.mxu0 0
    %132 = vmatpush1.bf16.msra.mxu0 0
    %133 = vmatprep.subr.bf16.mxu0 0
    %134 = vmatpush1.bf16.msra.mxu0 0
    %135 = vmatprep.subr.bf16.mxu0 0
    %136 = vmatpush1.bf16.msra.mxu0 0
    %137 = vmatprep.subr.bf16.mxu0 0
    %138 = vmatpush1.bf16.msra.mxu0 0
    %139 = vmatprep.subr.bf16.mxu0 0
    %140 = vmatpush1.bf16.msra.mxu0 0
    %141 = vmatprep.subr.bf16.mxu0 0
    %142 = vmatpush1.bf16.msra.mxu0 0
    %143 = vmatprep.subr.bf16.mxu0 0
    %144 = vmatpush1.bf16.msra.mxu0 0
    %145 = vmatprep.subr.bf16.mxu0 0
    %146 = vmatpush1.bf16.msra.mxu0 0
    %147 = vmatprep.subr.bf16.mxu0 0
    %148 = vmatpush1.bf16.msra.mxu0 0
    %149 = vmatprep.subr.bf16.mxu0 0
    %150 = vmatpush1.bf16.msra.mxu0 0
    %151 = vmatprep.subr.bf16.mxu0 0
    %152 = vmatpush1.bf16.msra.mxu0 0
    %153 = vmatprep.subr.bf16.mxu0 0
    %154 = vmatpush1.bf16.msra.mxu0 0
    %155 = vmatprep.subr.bf16.mxu0 0
    %156 = vmatpush1.bf16.msra.mxu0 0
    %157 = vmatprep.mubr.bf16.mxu0 0
    %158 = vmatmul.mubr.bf16.gmra.mrb[0].mxu0 %v72
    %v159 = vpop.f32.mrb[0].mxu0
    %v160 = vadd.f32 %v42, %v159
    %v161 = vpop.f32.mrb[0].mxu0
    %v162 = vpop.f32.mrb[0].mxu0
    %v163 = vpop.f32.mrb[0].mxu0
    %164 = vdwg.mxu0
    %v165 = vmax.f32 %v119, 0.0
    %v166 = vmax.f32 %v121, 0.0
    %v167 = vmax.f32 %v160, 0.0
    %v168 = vpack.c.bf16 %v165, %v165
    %v169 = vpack.c.bf16 %v166, %v166
    %v170 = vpack.c.bf16 %v167, %v167
    %v171 = vld [vmem:[%s3] sm:$0xf]
    %v172 = vld [vmem:[%s3 + $0x4] sm:$0xf]
    %v173 = vld [vmem:[%s3 + $0x8] sm:$0xf]
    %v174 = vld [vmem:[%s3 + $0xc] sm:$0xf]
    %v175 = vld [vmem:[%s3 + $0x10] sm:$0xf]
    %v176 = vld [vmem:[%s3 + $0x14] sm:$0xf]
    %v177 = vld [vmem:[%s3 + $0x18] sm:$0xf]
    %v178 = vld [vmem:[%s3 + $0x1c] sm:$0xf]
    %v179 = vld [vmem:[%s3 + $0x20] sm:$0xf]
    %v180 = vld [vmem:[%s3 + $0x24] sm:$0xf]
    %v181 = vld [vmem:[%s3 + $0x28] sm:$0xf]
    %v182 = vld [vmem:[%s3 + $0x2c] sm:$0xf]
    %v183 = vld [vmem:[%s3 + $0x30] sm:$0xf]
    %v184 = vld [vmem:[%s3 + $0x34] sm:$0xf]
    %v185 = vld [vmem:[%s3 + $0x38] sm:$0xf]
    %v186 = vld [vmem:[%s3 + $0x3c] sm:$0xf]
    %v187 = vld [vmem:[%s3 + $0x40] sm:$0xf]
    %v188 = vld [vmem:[%s3 + $0x44] sm:$0xf]
    %v189 = vld [vmem:[%s3 + $0x48] sm:$0xf]
    %v190 = vld [vmem:[%s3 + $0x4c] sm:$0xf]
    %v191 = vld [vmem:[%s3 + $0x50] sm:$0xf]
    %v192 = vld [vmem:[%s3 + $0x54] sm:$0xf]
    %v193 = vld [vmem:[%s3 + $0x58] sm:$0xf]
    %v194 = vld [vmem:[%s3 + $0x5c] sm:$0xf]
    %v195 = vld [vmem:[%s3 + $0x60] sm:$0xf]
    %v196 = vld [vmem:[%s3 + $0x64] sm:$0xf]
    %v197 = vld [vmem:[%s3 + $0x68] sm:$0xf]
    %v198 = vld [vmem:[%s3 + $0x6c] sm:$0xf]
    %v199 = vld [vmem:[%s3 + $0x70] sm:$0xf]
    %v200 = vld [vmem:[%s3 + $0x74] sm:$0xf]
    %v201 = vld [vmem:[%s3 + $0x78] sm:$0xf]
    %v202 = vld [vmem:[%s3 + $0x7c] sm:$0xf]
    %v203 = vld [vmem:[%s3 + $0x80] sm:$0xf]
    %v204 = vld [vmem:[%s3 + $0x84] sm:$0xf]
    %v205 = vld [vmem:[%s3 + $0x88] sm:$0xf]
    %v206 = vld [vmem:[%s3 + $0x8c] sm:$0xf]
    %v207 = vld [vmem:[%s3 + $0x90] sm:$0xf]
    %v208 = vld [vmem:[%s3 + $0x94] sm:$0x3]
    %v209 = vld [vmem:[%s4] sm:$0x1]
    %v211 = vlaneseq
    %v212 = vshrl.u32 %v211, 7
    %v213 = vsub.s32 0, %v212
    %v214 = vrot.slane %v209, %v213
    %v254 = vunpack.c.l.b16 %v171
    %v255 = vunpack.c.l.b16 %v172
    %v256 = vunpack.c.l.b16 %v173
    %v257 = vunpack.c.l.b16 %v174
    %v258 = vunpack.c.l.b16 %v175
    %v259 = vunpack.c.l.b16 %v176
    %v260 = vunpack.c.l.b16 %v177
    %v261 = vunpack.c.l.b16 %v178
    %v262 = vunpack.c.l.b16 %v179
    %v263 = vunpack.c.l.b16 %v180
    %v264 = vunpack.c.l.b16 %v181
    %v265 = vunpack.c.l.b16 %v182
    %v266 = vunpack.c.l.b16 %v183
    %v267 = vunpack.c.l.b16 %v184
    %v268 = vunpack.c.l.b16 %v185
    %v269 = vunpack.c.l.b16 %v186
    %v270 = vunpack.c.l.b16 %v187
    %v271 = vunpack.c.l.b16 %v188
    %v272 = vunpack.c.l.b16 %v189
    %v273 = vunpack.c.l.b16 %v190
    %v274 = vunpack.c.l.b16 %v191
    %v275 = vunpack.c.l.b16 %v192
    %v276 = vunpack.c.l.b16 %v193
    %v277 = vunpack.c.l.b16 %v194
    %v278 = vunpack.c.l.b16 %v195
    %v279 = vunpack.c.l.b16 %v196
    %v280 = vunpack.c.l.b16 %v197
    %v281 = vunpack.c.l.b16 %v198
    %v282 = vunpack.c.l.b16 %v199
    %v283 = vunpack.c.l.b16 %v200
    %v284 = vunpack.c.l.b16 %v201
    %v285 = vunpack.c.l.b16 %v202
    %v286 = vunpack.c.l.b16 %v203
    %v287 = vunpack.c.l.b16 %v204
    %v288 = vunpack.c.l.b16 %v205
    %v289 = vunpack.c.l.b16 %v206
    %v290 = vunpack.c.l.b16 %v207
    %v291 = vunpack.c.l.b16 %v208
    %v292 = vpack.c.b16 %v255, %v254
    %v293 = vpack.c.b16 %v257, %v256
    %v294 = vpack.c.b16 %v259, %v258
    %v295 = vpack.c.b16 %v261, %v260
    %v296 = vpack.c.b16 %v263, %v262
    %v297 = vpack.c.b16 %v265, %v264
    %v298 = vpack.c.b16 %v267, %v266
    %v299 = vpack.c.b16 %v269, %v268
    %v300 = vpack.c.b16 %v271, %v270
    %v301 = vpack.c.b16 %v273, %v272
    %v302 = vpack.c.b16 %v275, %v274
    %v303 = vpack.c.b16 %v277, %v276
    %v304 = vpack.c.b16 %v279, %v278
    %v305 = vpack.c.b16 %v281, %v280
    %v306 = vpack.c.b16 %v283, %v282
    %v307 = vpack.c.b16 %v285, %v284
    %v308 = vpack.c.b16 %v287, %v286
    %v309 = vpack.c.b16 %v289, %v288
    %v310 = vpack.c.b16 %v291, %v290
    %vm329 = vcmask 359424
    %v331 = vsel %vm329, %v170, 0
    %vm333 = vcmask 1045504
    %v335 = vsel %vm333, %v310, 0
    %337 = vmatprep.subr.bf16.mxu0 0
    %338 = vmatpush1.bf16.msra.mxu0 %v292
    %339 = vmatprep.subr.bf16.mxu0 0
    %340 = vmatpush1.bf16.msra.mxu0 %v293
    %341 = vmatprep.subr.bf16.mxu0 0
    %342 = vmatpush1.bf16.msra.mxu0 %v294
    %343 = vmatprep.subr.bf16.mxu0 0
    %344 = vmatpush1.bf16.msra.mxu0 %v295
    %345 = vmatprep.subr.bf16.mxu0 0
    %346 = vmatpush1.bf16.msra.mxu0 %v296
    %347 = vmatprep.subr.bf16.mxu0 0
    %348 = vmatpush1.bf16.msra.mxu0 %v297
    %349 = vmatprep.subr.bf16.mxu0 0
    %350 = vmatpush1.bf16.msra.mxu0 %v298
    %351 = vmatprep.subr.bf16.mxu0 0
    %352 = vmatpush1.bf16.msra.mxu0 %v299
    %353 = vmatprep.subr.bf16.mxu0 0
    %354 = vmatpush1.bf16.msra.mxu0 %v300
    %355 = vmatprep.subr.bf16.mxu0 0
    %356 = vmatpush1.bf16.msra.mxu0 %v301
    %357 = vmatprep.subr.bf16.mxu0 0
    %358 = vmatpush1.bf16.msra.mxu0 %v302
    %359 = vmatprep.subr.bf16.mxu0 0
    %360 = vmatpush1.bf16.msra.mxu0 %v303
    %361 = vmatprep.subr.bf16.mxu0 0
    %362 = vmatpush1.bf16.msra.mxu0 %v304
    %363 = vmatprep.subr.bf16.mxu0 0
    %364 = vmatpush1.bf16.msra.mxu0 %v305
    %365 = vmatprep.subr.bf16.mxu0 0
    %366 = vmatpush1.bf16.msra.mxu0 %v306
    %367 = vmatprep.subr.bf16.mxu0 0
    %368 = vmatpush1.bf16.msra.mxu0 %v307
    %369 = vmatprep.mubr.bf16.mxu0 %v169
    %370 = vmatmul.mubr.bf16.gmra.mrb[0].mxu0 %v168
    %v371 = vpop.f32.mrb[0].mxu0
    %v372 = vadd.f32 %v214, %v371
    %v373 = vpop.f32.mrb[0].mxu0
    %v374 = vpop.f32.mrb[0].mxu0
    %v375 = vpop.f32.mrb[0].mxu0
    %376 = vdwg.mxu0
    %377 = vmatprep.subr.bf16.mxu0 0
    %378 = vmatpush1.bf16.msra.mxu0 %v308
    %379 = vmatprep.subr.bf16.mxu0 0
    %380 = vmatpush1.bf16.msra.mxu0 %v309
    %381 = vmatprep.subr.bf16.mxu0 0
    %382 = vmatpush1.bf16.msra.mxu0 %v335
    %383 = vmatprep.subr.bf16.mxu0 0
    %384 = vmatpush1.bf16.msra.mxu0 0
    %385 = vmatprep.subr.bf16.mxu0 0
    %386 = vmatpush1.bf16.msra.mxu0 0
    %387 = vmatprep.subr.bf16.mxu0 0
    %388 = vmatpush1.bf16.msra.mxu0 0
    %389 = vmatprep.subr.bf16.mxu0 0
    %390 = vmatpush1.bf16.msra.mxu0 0
    %391 = vmatprep.subr.bf16.mxu0 0
    %392 = vmatpush1.bf16.msra.mxu0 0
    %393 = vmatprep.subr.bf16.mxu0 0
    %394 = vmatpush1.bf16.msra.mxu0 0
    %395 = vmatprep.subr.bf16.mxu0 0
    %396 = vmatpush1.bf16.msra.mxu0 0
    %397 = vmatprep.subr.bf16.mxu0 0
    %398 = vmatpush1.bf16.msra.mxu0 0
    %399 = vmatprep.subr.bf16.mxu0 0
    %400 = vmatpush1.bf16.msra.mxu0 0
    %401 = vmatprep.subr.bf16.mxu0 0
    %402 = vmatpush1.bf16.msra.mxu0 0
    %403 = vmatprep.subr.bf16.mxu0 0
    %404 = vmatpush1.bf16.msra.mxu0 0
    %405 = vmatprep.subr.bf16.mxu0 0
    %406 = vmatpush1.bf16.msra.mxu0 0
    %407 = vmatprep.subr.bf16.mxu0 0
    %408 = vmatpush1.bf16.msra.mxu0 0
    %409 = vmatprep.mubr.bf16.mxu0 0
    %410 = vmatmul.mubr.bf16.gmra.mrb[0].mxu0 %v331
    %v411 = vpop.f32.mrb[0].mxu0
    %v412 = vadd.f32 %v372, %v411
    %v413 = vpop.f32.mrb[0].mxu0
    %v414 = vpop.f32.mrb[0].mxu0
    %v415 = vpop.f32.mrb[0].mxu0
    %416 = vdwg.mxu0
    %417 = vmax.xlane.f32.xlu0 %v412
    %v418 = vpop.xlane.xlu0 %417
    %v419 = vsub.f32 %v412, %v418
    %v420 = vmul.f32 %v419, 1.442695
    %v421 = vpow.pop %v420
    %422 = vadd.xlane.f32.xlu0 %v421
    %v423 = vpop.xlane.xlu0 %422
    %v424 = vrcp.pop %v423
    %v425 = vmul.f32 %v421, %v424
    %426 = vst [vmem:[#allocation2] sm:$0xff] %v425
    // Predicated region
    $region22: #{bpnn_forward.1} parent=1 // pred_check
      _
    $region23: #{bpnn_forward.1} parent=1 // pred_check_branch
      %428 = sbr.rel (0) target = $region25
    $region24: #{bpnn_forward.1} parent=1 // pred_region
      %s430 = ssub.s32 128, 128
      %431 = vsyncadd [#allocation3], %s430
      %s433 = sshll.u32 [#allocation2], 4
      %s434 = int_to_ptr.vmem [resolvable:$true] %s433
      %436 = dma.vmem_to_hbm [thread:$0]  %s434, 128, %s5, [#allocation3]
    $region25: #{bpnn_forward.1} parent=1 // pred_fallthru
      _
    // Predicated region
    $region26: #{bpnn_forward.1} parent=1 // pred_check
      _
    $region27: #{bpnn_forward.1} parent=1 // pred_check_branch
      %438 = sbr.rel (0) target = $region29
    $region28: #{bpnn_forward.1} parent=1 // pred_region
      %439 = dma.done [#allocation3], 128
    $region29: #{bpnn_forward.1} parent=1 // pred_fallthru
      _
    %440 = vsyncpa [#allocation3], 1

</llo_original>
